<compile_context>
chip_gen: v5e
topology: v5e:2x2
jax: 0.10.0
libtpu: 0.0.40
codegen_flags: <defaults>
</compile_context>

<pallas_src>
import math

import jax
import jax.numpy as jnp
from jax.experimental import pallas as pl
from jax.experimental.pallas import tpu as pltpu


# ----------------------------- Pallas kernels -------------------------------

def _lora_kernel_fused(x_ref, a_ref, b_ref, o_ref):
    """One spatial slab, pre-fused weights.

    x_ref : (Cin, TS)   slab of spatial positions (channels on sublanes)
    a_ref : (Cout, Cin) fused weight  A = M @ W
    b_ref : (Cout, 1)   fused bias    b = M @ bW + bM   (f32)
    o_ref : (Cout, TS)  lane-dense output slab
    """
    # Contraction depth is tiny (Cin), so the MXU-vs-VPU choice is irrelevant
    # at the HBM roofline; jnp.dot keeps the operand feed path simple.
    y = jnp.dot(a_ref[...], x_ref[...],
                preferred_element_type=jnp.float32,
                precision=jax.lax.Precision.HIGHEST)
    o_ref[...] = (y + b_ref[...]).astype(o_ref.dtype)


def _lora_kernel_lowrank(x_ref, w_ref, bw_ref, m_ref, bm_ref, o_ref):
    """One spatial slab, two GEMMs (true low-rank path).

    x_ref : (Cin, TS)
    w_ref : (R, Cin)     bw_ref: (R, 1)     (f32 bias)
    m_ref : (Cout, R)    bm_ref: (Cout, 1)  (f32 bias)
    o_ref : (Cout, TS)
    """
    h = jnp.dot(w_ref[...], x_ref[...],
                preferred_element_type=jnp.float32,
                precision=jax.lax.Precision.HIGHEST) + bw_ref[...]
    y = jnp.dot(m_ref[...], h.astype(m_ref.dtype),
                preferred_element_type=jnp.float32,
                precision=jax.lax.Precision.HIGHEST) + bm_ref[...]
    o_ref[...] = y.astype(o_ref.dtype)


# ------------------------------- wrapper ------------------------------------

def _round_up(x, m):
    return -(-x // m) * m


def _pick_spatial_tile(hw, n_batch, cin, cout, itemsize,
                       max_tile, vmem_budget_bytes):
    """Lane-axis (spatial) tile width.

    Rules:
      * multiple of 128 (unmasked, lane-dense stores) unless H*W itself is
        <= 128 (full-dim block is the only legal sub-128 lane width);
      * as large as possible (MiB-scale DMA per grid step amortizes the
        ~0.35us fixed per-step overhead) but capped so the double-buffered
        x/out blocks plus the f32 matmul intermediate fit the smallest
        scoped-VMEM default across generations (v5e: 16 MiB, v7x: 32 MiB);
      * keep >= 2 grid programs so megacore / v7x's two TCs both get work.
    Ragged H*W is handled by grid = cdiv(HW, ts) with Pallas block clamping;
    there is no wrapper-side padding.
    """
    if hw <= 128:
        return hw
    ts = min(max_tile, (hw // 128) * 128)
    # Double-buffered x + out blocks plus the f32 (Cout, ts) intermediate.
    per_lane_bytes = 2 * (cin + cout) * itemsize + cout * 4
    cap = max(128, (vmem_budget_bytes // per_lane_bytes) // 128 * 128)
    ts = min(ts, cap)
    # Make sure a v7x chip's two TensorCores both get a program.
    if n_batch * pl.cdiv(hw, ts) < 2 and ts > 128:
        ts = min(ts, _round_up(pl.cdiv(hw, 2), 128))
    return ts


def lora_block_apply(x_nchw, w_weight, w_bias, m_weight, m_bias,
                     *, max_spatial_tile=65536, vmem_budget_bytes=12 << 20,
                     fuse=None):
    """Apply LoraBlock (kernel_size=1) to an NCHW input.

    x_nchw  : (N, Cin, H, W)
    w_weight: (R, Cin, 1, 1)   -- PyTorch conv weight layout
    w_bias  : (R,)
    m_weight: (Cout, R, 1, 1)
    m_bias  : (Cout,)
    returns : (N, Cout, H, W)  in x_nchw.dtype (f32 or bf16)
    """
    N, Cin, H, W = x_nchw.shape
    R = w_weight.shape[0]
    Cout = m_weight.shape[0]
    if w_weight.shape[2] != 1 or w_weight.shape[3] != 1:
        # TODO(synk): kernel_size>1 spatial conv for W is not implemented.
        raise NotImplementedError(
            "LoraBlock Pallas kernel supports kernel_size=1 only")
    dtype = x_nchw.dtype
    itemsize = jnp.dtype(dtype).itemsize
    HW = H * W

    # NCHW -> (N, Cin, H*W): a free view, no data movement.
    x3 = x_nchw.reshape(N, Cin, HW)

    ts = _pick_spatial_tile(HW, N, Cin, Cout, itemsize,
                            max_spatial_tile, vmem_budget_bytes)
    n_sp = pl.cdiv(HW, ts)

    # Conv weights to matmul form (channels-on-sublane orientation).
    w_mat = w_weight.reshape(R, Cin).astype(dtype)        # (R, Cin)
    m_mat = m_weight.reshape(Cout, R).astype(dtype)       # (Cout, R)
    bw = w_bias.reshape(R, 1).astype(jnp.float32)         # (R, 1)
    bm = m_bias.reshape(Cout, 1).astype(jnp.float32)      # (Cout, 1)

    if fuse is None:
        # HBM bandwidth, not FLOPs, is binding at LoRA channel sizes: default
        # to the single fused GEMM (fewer MXU pushes, half the weight DMA,
        # no serialized GEMM->GEMM dependency inside every tile).
        fuse = True

    grid = (N, n_sp)
    out_shape = jax.ShapeDtypeStruct((N, Cout, HW), dtype)

    # x/out blocks: squeeze the batch dim, full channel dim, tiled spatial dim.
    x_spec = pl.BlockSpec((None, Cin, ts), lambda n, j: (n, 0, j))
    o_spec = pl.BlockSpec((None, Cout, ts), lambda n, j: (n, 0, j))

    def full_spec(shape):
        return pl.BlockSpec(shape, lambda n, j: (0,) * len(shape))

    compiler_params = pltpu.CompilerParams(
        # Both grid axes are independent (no reduction): batch x spatial.
        dimension_semantics=("parallel", "parallel"))

    act_bytes = N * (Cin + Cout) * HW * itemsize

    if fuse:
        a_eff = jnp.dot(m_mat.astype(jnp.float32),
                        w_mat.astype(jnp.float32)).astype(dtype)      # (Cout, Cin)
        b_eff = jnp.dot(m_mat.astype(jnp.float32), bw) + bm           # (Cout, 1) f32
        cost = pl.CostEstimate(
            flops=2 * N * Cout * Cin * HW, transcendentals=0,
            bytes_accessed=act_bytes + a_eff.size * itemsize + b_eff.size * 4)
        out3 = pl.pallas_call(
            _lora_kernel_fused,
            out_shape=out_shape,
            grid_spec=pltpu.PrefetchScalarGridSpec(
                num_scalar_prefetch=0,
                grid=grid,
                in_specs=[x_spec,
                          full_spec((Cout, Cin)),
                          full_spec((Cout, 1))],
                out_specs=o_spec),
            compiler_params=compiler_params,
            cost_estimate=cost,
        )(x3, a_eff, b_eff)
    else:
        cost = pl.CostEstimate(
            flops=2 * N * R * (Cin + Cout) * HW, transcendentals=0,
            bytes_accessed=(act_bytes + (w_mat.size + m_mat.size) * itemsize
                            + (bw.size + bm.size) * 4))
        out3 = pl.pallas_call(
            _lora_kernel_lowrank,
            out_shape=out_shape,
            grid_spec=pltpu.PrefetchScalarGridSpec(
                num_scalar_prefetch=0,
                grid=grid,
                in_specs=[x_spec,
                          full_spec((R, Cin)),
                          full_spec((R, 1)),
                          full_spec((Cout, R)),
                          full_spec((Cout, 1))],
                out_specs=o_spec),
            compiler_params=compiler_params,
            cost_estimate=cost,
        )(x3, w_mat, bw, m_mat, bm)

    return out3.reshape(N, Cout, H, W)


# ----------------------- deterministic parameter init -----------------------

def _kaiming_uniform_conv(key, out_ch, in_ch, k=1, a=math.sqrt(5)):
    # Matches torch.nn.init.kaiming_uniform_ with a=sqrt(5).
    fan_in = in_ch * k * k
    gain = math.sqrt(2.0 / (1.0 + a * a))
    bound = gain * math.sqrt(3.0 / fan_in)
    return jax.random.uniform(key, (out_ch, in_ch, k, k),
                              minval=-bound, maxval=bound, dtype=jnp.float32)


def make_lora_params(key, in_channels, out_channels, rank=6):
    kw, kbw, km, kbm = jax.random.split(key, 4)
    w_weight = _kaiming_uniform_conv(kw, rank, in_channels)
    m_weight = _kaiming_uniform_conv(km, out_channels, rank)
    # nn.Conv2d default bias init: U(-1/sqrt(fan_in), 1/sqrt(fan_in))
    bw_bound = 1.0 / math.sqrt(in_channels)
    bm_bound = 1.0 / math.sqrt(rank)
    w_bias = jax.random.uniform(kbw, (rank,), minval=-bw_bound, maxval=bw_bound,
                                dtype=jnp.float32)
    m_bias = jax.random.uniform(kbm, (out_channels,), minval=-bm_bound,
                                maxval=bm_bound, dtype=jnp.float32)
    return w_weight, w_bias, m_weight, m_bias


# ----------------------------- pure-JAX reference ----------------------------

def _reference(x, w_weight, w_bias, m_weight, m_bias):
    N, Cin, H, W = x.shape
    R = w_weight.shape[0]
    Cout = m_weight.shape[0]
    x_tok = jnp.transpose(x, (0, 2, 3, 1)).reshape(-1, Cin).astype(jnp.float32)
    h = x_tok @ w_weight.reshape(R, Cin).T.astype(jnp.float32) + w_bias
    y = h @ m_weight.reshape(Cout, R).T.astype(jnp.float32) + m_bias
    return jnp.transpose(y.reshape(N, H, W, Cout), (0, 3, 1, 2))


# --------------------------------- main --------------------------------------

if __name__ == "__main__":
    key = jax.random.PRNGKey(0)
    k_x, k_x2, k_p = jax.random.split(key, 3)

    # Small shapes consistent with the module: N=2, Cin=4, H=W=16, Cout=8, rank=6.
    N, Cin, H, W = 2, 4, 16, 16
    Cout, rank = 8, 6

    x = jax.random.normal(k_x, (N, Cin, H, W), dtype=jnp.float32)
    w_weight, w_bias, m_weight, m_bias = make_lora_params(k_p, Cin, Cout, rank)
    ref = _reference(x, w_weight, w_bias, m_weight, m_bias)

    # 1) Fused single-GEMM path (default).
    out = jax.block_until_ready(
        lora_block_apply(x, w_weight, w_bias, m_weight, m_bias))
    assert out.shape == (N, Cout, H, W)
    assert jnp.allclose(out, ref, atol=1e-5, rtol=1e-5), \
        float(jnp.max(jnp.abs(out - ref)))

    # 2) Two-GEMM low-rank path (coverage of the second kernel).
    out_lr = jax.block_until_ready(
        lora_block_apply(x, w_weight, w_bias, m_weight, m_bias, fuse=False))
    assert jnp.allclose(out_lr, ref, atol=1e-5, rtol=1e-5), \
        float(jnp.max(jnp.abs(out_lr - ref)))

    # 3) Ragged spatial extent (H*W = 130, not a multiple of 128): exercises
    #    the block-clamped tail — no jnp.pad / output slice anywhere.
    Hr, Wr = 10, 13
    xr = jax.random.normal(k_x2, (N, Cin, Hr, Wr), dtype=jnp.float32)
    ref_r = _reference(xr, w_weight, w_bias, m_weight, m_bias)
    out_r = jax.block_until_ready(
        lora_block_apply(xr, w_weight, w_bias, m_weight, m_bias))
    assert out_r.shape == (N, Cout, Hr, Wr)
    assert jnp.allclose(out_r, ref_r, atol=1e-5, rtol=1e-5), \
        float(jnp.max(jnp.abs(out_r - ref_r)))

    # 4) bf16 activation path (halves HBM bytes; f32 accumulate + f32 bias).
    x_bf = x.astype(jnp.bfloat16)
    ref_bf = _reference(x_bf.astype(jnp.float32), w_weight, w_bias,
                        m_weight, m_bias)
    out_bf = jax.block_until_ready(
        lora_block_apply(x_bf, w_weight, w_bias, m_weight, m_bias))
    assert out_bf.dtype == jnp.bfloat16
    assert jnp.allclose(out_bf.astype(jnp.float32), ref_bf,
                        atol=5e-2, rtol=5e-2), \
        float(jnp.max(jnp.abs(out_bf.astype(jnp.float32) - ref_bf)))

    print("KERNEL_OK")
</pallas_src>

<mosaic_0001>
module attributes {stable_mosaic.version = 11 : i64} {
  func.func @_lora_kernel_fused(%arg0: i32, %arg1: i32, %arg2: memref<1x4x256xf32, #tpu.memory_space<vmem>>, %arg3: memref<8x4xf32, #tpu.memory_space<vmem>>, %arg4: memref<8x1xf32, #tpu.memory_space<vmem>>, %arg5: memref<1x8x256xf32, #tpu.memory_space<vmem>>) attributes {dimension_semantics = [#tpu.dimension_semantics<parallel>, #tpu.dimension_semantics<parallel>], iteration_bounds = array<i64: 2, 1>, scalar_prefetch = 0 : i64, scratch_operands = 0 : i64, tpu.core_type = #tpu.core_type<tc>, window_params = [{transform_indices = @transform_0, window_bounds = array<i64: 1, 4, 256>}, {pipeline_mode = #tpu.pipeline_mode<synchronous>, transform_indices = @transform_1, window_bounds = array<i64: 8, 4>}, {pipeline_mode = #tpu.pipeline_mode<synchronous>, transform_indices = @transform_2, window_bounds = array<i64: 8, 1>}, {transform_indices = @transform_3, window_bounds = array<i64: 1, 8, 256>}]} {
    %c0 = arith.constant 0 : index
    %c0_0 = arith.constant 0 : index
    %0 = vector.load %arg3[%c0, %c0_0] : memref<8x4xf32, #tpu.memory_space<vmem>>, vector<8x4xf32>
    %c0_1 = arith.constant 0 : index
    %c0_2 = arith.constant 0 : index
    %c0_3 = arith.constant 0 : index
    %1 = vector.load %arg2[%c0_1, %c0_2, %c0_3] : memref<1x4x256xf32, #tpu.memory_space<vmem>>, vector<1x4x256xf32>
    %2 = vector.shape_cast %1 : vector<1x4x256xf32> to vector<4x256xf32>
    %cst = arith.constant dense<0.000000e+00> : vector<8x256xf32>
    %3 = tpu.matmul %0, %2, %cst {dimension_numbers = #tpu.dot_dimension_numbers<[1], [0], [0], [1], [0, 0, 1, 1], [], []>, precision = #tpu.contract_precision<fp32>} : vector<8x4xf32>, vector<4x256xf32>, vector<8x256xf32> -> vector<8x256xf32>
    %c0_4 = arith.constant 0 : index
    %c0_5 = arith.constant 0 : index
    %4 = vector.load %arg4[%c0_4, %c0_5] : memref<8x1xf32, #tpu.memory_space<vmem>>, vector<8x1xf32>
    %5 = vector.broadcast %4 : vector<8x1xf32> to vector<8x256xf32>
    %6 = arith.addf %3, %5 : vector<8x256xf32>
    %c0_6 = arith.constant 0 : index
    %c0_7 = arith.constant 0 : index
    %c0_8 = arith.constant 0 : index
    %7 = vector.load %arg5[%c0_6, %c0_7, %c0_8] : memref<1x8x256xf32, #tpu.memory_space<vmem>>, vector<1x8x256xf32>
    %8 = vector.shape_cast %7 : vector<1x8x256xf32> to vector<8x256xf32>
    %9 = vector.shape_cast %6 : vector<8x256xf32> to vector<1x8x256xf32>
    tpu.vector_store %arg5[%c0_6, %c0_7, %c0_8], %9 {strides = array<i32>} : memref<1x8x256xf32, #tpu.memory_space<vmem>>, vector<1x8x256xf32>,
    return
  }
  func.func @transform_0(%arg0: i32, %arg1: i32) -> (i32, i32, i32) {
    %c0_i32 = arith.constant 0 : i32
    %c0_i32_0 = arith.constant 0 : i32
    return %arg0, %c0_i32, %arg1 : i32, i32, i32
  }
  func.func @transform_1(%arg0: i32, %arg1: i32) -> (i32, i32) {
    %c0_i32 = arith.constant 0 : i32
    %c0_i32_0 = arith.constant 0 : i32
    %c0_i32_1 = arith.constant 0 : i32
    return %c0_i32, %c0_i32_0 : i32, i32
  }
  func.func @transform_2(%arg0: i32, %arg1: i32) -> (i32, i32) {
    %c0_i32 = arith.constant 0 : i32
    %c0_i32_0 = arith.constant 0 : i32
    %c0_i32_1 = arith.constant 0 : i32
    return %c0_i32, %c0_i32_0 : i32, i32
  }
  func.func @transform_3(%arg0: i32, %arg1: i32) -> (i32, i32, i32) {
    %c0_i32 = arith.constant 0 : i32
    %c0_i32_0 = arith.constant 0 : i32
    return %arg0, %c0_i32, %arg1 : i32, i32, i32
  }
}

</mosaic_0001>

<llo_original>
// kernel: tpu_custom_call.1
$region0: #{tpu_custom_call.1}
  #allocation0 [shape = 'u32[]', space=smem, size = 0x4, offset = 0x4, fixed_abs, tag = 'smem constant byte address 0x4 - core index']
  #allocation1 [shape = 'u32[72,128]{1,0:T(1,128)}', space=vmem, size = 0x9000, scoped, tag = 'internal scratch']
  %s0 = inlined_call_operand.vmem [shape: f32[2,4,256], index: 0, kind: input, shape index: {}]
  %s1 = inlined_call_operand.vmem [shape: f32[8,4], index: 1, kind: input, shape index: {}]
  %s2 = inlined_call_operand.vmem [shape: f32[8,1], index: 2, kind: input, shape index: {}]
  %s3 = inlined_call_operand.hbm [shape: f32[2,8,256], index: 3, kind: output, shape index: {}]
  %s4 = sld [smem:[#allocation0]]
  $region45: #{tpu_custom_call.1} parent=0
    _
  %s6 = ssub.s32 1, %s4
  %s7 = scalar_select 0, %s6, %s4
  $region1: #{tpu_custom_call.1} parent=0
    #allocation2 [shape = 'u8[16384]{0}', space=vmem, size = 0x4000, scoped, tag = 'output window, operand 0']
    #allocation3 [shape = 's32[2]{0}', space=sflag, size = 0x8, scoped, tag = 'scoped memory for tpu_custom_call.1']
    %8 = vsyncpa [#allocation3], 0
    %s9 = scalar_lea.sflag [#allocation3], 1
    %10 = vsyncpa %s9, 0
    loop: start=0, step=1, limit=4
    $region2: #{tpu_custom_call.1} parent=1 // loop_pre_header
      _
    $region3: #{tpu_custom_call.1} parent=1 // loop_header
      %s12 = sphi 0, %s16
      %p13 = scmp.ge.s32.totalorder %s12, 4
      %s19 = sphi 0, %s31
      %s20 = sphi 0, %s27
      %s21 = sphi 0, %s19
      %s22 = sphi 0, %s20
      %s23 = sphi 0, %s21
      %s24 = sphi 0, %s22
      %s36 = sphi 0, %s38
      %s39 = sphi 0, %s36
      %s40 = sphi 0, %s39
      %s56 = sphi 0, %s40
      %s60 = sphi 0, %s60
      %s62 = sphi 0, %s60
      %s63 = sphi 0, %s62
      %s77 = sphi 0, %s63
      %s81 = sphi 0, %s81
      %s83 = sphi 0, %s81
      %s84 = sphi 0, %s83
      %s98 = sphi 0, %s84
      %s106 = sphi 0, %s108
      %s109 = sphi 0, %s106
      %s110 = sphi 0, %s109
      %s126 = sphi 0, %s110
    $region4: #{tpu_custom_call.1} parent=1 // loop_header_branch
      %15 = sbr.rel (%p13) target = $region8
    $region5: #{tpu_custom_call.1} parent=1 // loop_body
      %s17 = ssub.s32 %s12, 1
      %s18 = ssub.s32 %s12, 2
      %s25 = sadd.s32 1, %s20
      %p26 = scmp.ge.s32.totalorder %s25, 1
      %s27 = scalar_select %p26, 0, %s25
      %s28 = sadd.s32 1, %s19
      %s29 = scalar_select %p26, %s28, %s19
      %p30 = scmp.ge.s32.totalorder %s29, 2
      %s31 = scalar_select %p30, 0, %s29
      %s32 = ssub.s32 %s19, %s31
      %s33 = ssub.s32 %s20, %s27
      %s34 = sor.u32 %s32, %s33
      %p35 = scmp.eq.s32.totalorder %s34, 0
      %s37 = sadd.s32 %s36, 1
      %s38 = scalar_select %p35, %s36, %s37
      %p41 = pneg %p35
      %p42 = scmp.eq.s32.totalorder %s12, 1
      %p43 = por %p41, %p42
      %p44 = scmp.ne.s32.totalorder %s36, %s39
      %p45 = scmp.eq.s32.totalorder %s12, 0
      %p46 = por %p44, %p45
      %p47 = scmp.ne.s32.totalorder %s36, %s39
      %p48 = scmp.eq.s32.totalorder %s17, 1
      %p49 = por %p47, %p48
      %p50 = scmp.ne.s32.totalorder %s39, %s40
      %p51 = scmp.eq.s32.totalorder %s17, 0
      %p52 = por %p50, %p51
      %p53 = scmp.ne.s32.totalorder %s39, %s40
      %p54 = scmp.eq.s32.totalorder %s18, 1
      %p55 = por %p53, %p54
      %p57 = scmp.ne.s32.totalorder %s40, %s56
      %p58 = scmp.eq.s32.totalorder %s18, 0
      %p59 = por %p57, %p58
      %s61 = sadd.s32 %s60, 1
      %p64 = scmp.eq.s32.totalorder %s12, 1
      %p65 = scmp.ne.s32.totalorder %s60, %s62
      %p66 = scmp.eq.s32.totalorder %s12, 0
      %p67 = por %p65, %p66
      %p68 = scmp.ne.s32.totalorder %s60, %s62
      %p69 = scmp.eq.s32.totalorder %s17, 1
      %p70 = por %p68, %p69
      %p71 = scmp.ne.s32.totalorder %s62, %s63
      %p72 = scmp.eq.s32.totalorder %s17, 0
      %p73 = por %p71, %p72
      %p74 = scmp.ne.s32.totalorder %s62, %s63
      %p75 = scmp.eq.s32.totalorder %s18, 1
      %p76 = por %p74, %p75
      %p78 = scmp.ne.s32.totalorder %s63, %s77
      %p79 = scmp.eq.s32.totalorder %s18, 0
      %p80 = por %p78, %p79
      %s82 = sadd.s32 %s81, 1
      %p85 = scmp.eq.s32.totalorder %s12, 1
      %p86 = scmp.ne.s32.totalorder %s81, %s83
      %p87 = scmp.eq.s32.totalorder %s12, 0
      %p88 = por %p86, %p87
      %p89 = scmp.ne.s32.totalorder %s81, %s83
      %p90 = scmp.eq.s32.totalorder %s17, 1
      %p91 = por %p89, %p90
      %p92 = scmp.ne.s32.totalorder %s83, %s84
      %p93 = scmp.eq.s32.totalorder %s17, 0
      %p94 = por %p92, %p93
      %p95 = scmp.ne.s32.totalorder %s83, %s84
      %p96 = scmp.eq.s32.totalorder %s18, 1
      %p97 = por %p95, %p96
      %p99 = scmp.ne.s32.totalorder %s84, %s98
      %p100 = scmp.eq.s32.totalorder %s18, 0
      %p101 = por %p99, %p100
      %s102 = ssub.s32 %s19, %s31
      %s103 = ssub.s32 %s20, %s27
      %s104 = sor.u32 %s102, %s103
      %p105 = scmp.eq.s32.totalorder %s104, 0
      %s107 = sadd.s32 %s106, 1
      %s108 = scalar_select %p105, %s106, %s107
      %p111 = pneg %p105
      %p112 = scmp.eq.s32.totalorder %s12, 1
      %p113 = por %p111, %p112
      %p114 = scmp.ne.s32.totalorder %s106, %s109
      %p115 = scmp.eq.s32.totalorder %s12, 0
      %p116 = por %p114, %p115
      %p117 = scmp.ne.s32.totalorder %s106, %s109
      %p118 = scmp.eq.s32.totalorder %s17, 1
      %p119 = por %p117, %p118
      %p120 = scmp.ne.s32.totalorder %s109, %s110
      %p121 = scmp.eq.s32.totalorder %s17, 0
      %p122 = por %p120, %p121
      %p123 = scmp.ne.s32.totalorder %s109, %s110
      %p124 = scmp.eq.s32.totalorder %s18, 1
      %p125 = por %p123, %p124
      %p127 = scmp.ne.s32.totalorder %s110, %s126
      %p128 = scmp.eq.s32.totalorder %s18, 0
      %p129 = por %p127, %p128
      %p130 = scmp.le.s32.totalorder 1, %s12
      %p131 = scmp.lt.s32.totalorder %s12, 3
      %p132 = pnand %p130, %p131
      %p133 = pneg %p132
      // Predicated region
      $region9: #{tpu_custom_call.1} parent=5 // pred_check
        _
      $region10: #{tpu_custom_call.1} parent=5 // pred_check_branch
        %135 = sbr.rel (%p132) target = $region12
      $region11: #{tpu_custom_call.1} parent=5 // pred_region
        %s136 = ssub.s32 %s12, 1
        // Predicated region
        $region13: #{tpu_custom_call.1} parent=11 // pred_check
          %p137 = pneg %p73
        $region14: #{tpu_custom_call.1} parent=11 // pred_check_branch
          %139 = sbr.rel (%p137) target = $region16
        $region15: #{tpu_custom_call.1} parent=11 // pred_region
          _
        $region16: #{tpu_custom_call.1} parent=11 // pred_fallthru
          _
        // Predicated region
        $region17: #{tpu_custom_call.1} parent=11 // pred_check
          %p140 = pneg %p94
        $region18: #{tpu_custom_call.1} parent=11 // pred_check_branch
          %142 = sbr.rel (%p140) target = $region20
        $region19: #{tpu_custom_call.1} parent=11 // pred_region
          _
        $region20: #{tpu_custom_call.1} parent=11 // pred_fallthru
          _
      $region12: #{tpu_custom_call.1} parent=5 // pred_fallthru
        _
      %p143 = scmp.lt.s32.totalorder %s12, 2
      // Predicated region
      $region21: #{tpu_custom_call.1} parent=5 // pred_check
        %p144 = pneg %p143
      $region22: #{tpu_custom_call.1} parent=5 // pred_check_branch
        %146 = sbr.rel (%p144) target = $region24
      $region23: #{tpu_custom_call.1} parent=5 // pred_region
        // Predicated region
        $region25: #{tpu_custom_call.1} parent=23 // pred_check
          %p147 = pneg %p46
        $region26: #{tpu_custom_call.1} parent=23 // pred_check_branch
          %149 = sbr.rel (%p147) target = $region28
        $region27: #{tpu_custom_call.1} parent=23 // pred_region
          %s150 = smul.u32 2, %s20
          %p151 = scmp.lt.s32.totalorder %s19, 1
          %s152 = scalar_select %p151, %s19, 1
          %p153 = scmp.lt.s32.totalorder %s150, 1
          %s154 = scalar_select %p153, %s150, 1
          %s155 = smul.addr %s152, 2
          %s156 = sadd.s32 %s154, %s155
          %s157 = smul.addr %s156, 4
          %s158 = scalar_lea.vmem %s0, %s157
          %s159 = smul.u32 2, %s20
        $region28: #{tpu_custom_call.1} parent=23 // pred_fallthru
          _
      $region24: #{tpu_custom_call.1} parent=5 // pred_fallthru
        _
      %p160 = scmp.le.s32.totalorder 1, %s12
      %p161 = scmp.lt.s32.totalorder %s12, 3
      %p162 = pnand %p160, %p161
      %p163 = pneg %p162
      // Predicated region
      $region29: #{tpu_custom_call.1} parent=5 // pred_check
        _
      $region30: #{tpu_custom_call.1} parent=5 // pred_check_branch
        %165 = sbr.rel (%p162) target = $region32
      $region31: #{tpu_custom_call.1} parent=5 // pred_region
        %s166 = ssub.s32 %s12, 1
        %s167 = smul.u32 2, %s22
        %p168 = scmp.lt.s32.totalorder %s21, 1
        %s169 = scalar_select %p168, %s21, 1
        %p170 = scmp.lt.s32.totalorder %s167, 1
        %s171 = scalar_select %p170, %s167, 1
        %s172 = smul.addr %s169, 2
        %s173 = sadd.s32 %s171, %s172
        %s174 = smul.addr %s173, 4
        %s175 = scalar_lea.vmem %s0, %s174
        %p176 = pneg %p52
        %p177 = pneg %p49
        %p178 = pneg %p73
        %p179 = pneg %p70
        %p180 = pneg %p94
        %p181 = pneg %p91
        %p182 = pneg %p122
        %p183 = pneg %p119
        %s184 = sand.u32 %s109, 1
        %s185 = scalar_lea.sflag [#allocation3], %s184
        %s186 = sand.u32 %s109, 1
        %s187 = smul.addr %s186, 16
        %s188 = scalar_lea.vmem [#allocation2], %s187
        %s189 = smul.u32 2, %s22
        %p190 = scmp.lt.s32.totalorder %s21, 1
        %s191 = scalar_select %p190, %s21, 1
        %p192 = scmp.lt.s32.totalorder %s189, 1
        %s193 = scalar_select %p192, %s189, 1
        %s194 = smul.addr %s191, 2
        %s195 = sadd.s32 %s193, %s194
        %s196 = smul.addr %s195, 4
        %s197 = scalar_lea.vmem %s0, %s196
        %s198 = smul.u32 2, %s22
        %s199 = smul.u32 2, %s22
        %v200 = vld [vmem:[%s1] sm:$0xff]
        %v201 = vld [vmem:[%s197] sm:$0xff]
        %v202 = vld [vmem:[%s2] sm:$0xff]
        %204 = vset.pattern.permute.xlu0 0
        %205 = vperm.xlu0 %204, %v202
        %v206 = vpop.permute.xlu0 %205
        %209 = vst [vmem:[#allocation1] ss:$2 sm:$0xff] %v201
        %v210 = vld.sshfl [vmem:[#allocation1] sm:$0xff pattern:$0x75316420]
        %v211 = vld.sshfl [vmem:[#allocation1 + $0x8] sm:$0xff pattern:$0x75316420]
        %vm212 = vcmask 31744
        %v214 = vsel %vm212, %v200, 0
        %vm216 = vcmask 1043456
        %v217 = vsel %vm216, %v210, 0
        %v219 = vsel %vm216, %v211, 0
        %221 = vmatpush.msra.mxu0 0.0
        %222 = vmatpush.msra.mxu0 0.0
        %223 = vmatpush.msra.mxu0 0.0
        %224 = vmatpush.msra.mxu0 0.0
        %225 = vmatpush.msra.mxu0 0.0
        %226 = vmatpush.msra.mxu0 0.0
        %227 = vmatpush.msra.mxu0 0.0
        %228 = vmatpush.msra.mxu0 0.0
        %229 = vmatpush.msra.mxu0 0.0
        %230 = vmatpush.msra.mxu0 0.0
        %231 = vmatpush.msra.mxu0 0.0
        %232 = vmatpush.msra.mxu0 0.0
        %233 = vmatpush.msra.mxu0 0.0
        %234 = vmatpush.msra.mxu0 0.0
        %235 = vmatpush.msra.mxu0 0.0
        %v236 = vand.u32 %v217, 4294901760
        %237 = vmatpush.msra.mxu0 %v236
        %v238 = vand.u32 %v214, 4294901760
        %v239 = vsub.f32 %v214, %v238
        %v240 = vand.u32 %v239, 4294901760
        %v241 = vsub.f32 %v239, %v240
        %v242 = vand.u32 %v241, 4294901760
        %243 = vmatmul.f32.gmra.mxu0 %v242
        %v244 = vpop.f32.mrf.mxu0
        %v245 = vadd.f32 %v206, %v244
        %246 = vdwg.mxu0
        %247 = vmatpush.msra.mxu0 0.0
        %248 = vmatpush.msra.mxu0 0.0
        %249 = vmatpush.msra.mxu0 0.0
        %250 = vmatpush.msra.mxu0 0.0
        %251 = vmatpush.msra.mxu0 0.0
        %252 = vmatpush.msra.mxu0 0.0
        %253 = vmatpush.msra.mxu0 0.0
        %254 = vmatpush.msra.mxu0 0.0
        %255 = vmatpush.msra.mxu0 0.0
        %256 = vmatpush.msra.mxu0 0.0
        %257 = vmatpush.msra.mxu0 0.0
        %258 = vmatpush.msra.mxu0 0.0
        %259 = vmatpush.msra.mxu0 0.0
        %260 = vmatpush.msra.mxu0 0.0
        %261 = vmatpush.msra.mxu0 0.0
        %v262 = vand.u32 %v217, 4294901760
        %v263 = vsub.f32 %v217, %v262
        %v264 = vand.u32 %v263, 4294901760
        %v265 = vsub.f32 %v263, %v264
        %v266 = vand.u32 %v265, 4294901760
        %267 = vmatpush.msra.mxu0 %v266
        %v268 = vand.u32 %v214, 4294901760
        %269 = vmatmul.f32.gmra.mxu0 %v268
        %v270 = vpop.f32.mrf.mxu0
        %v271 = vadd.f32 %v245, %v270
        %272 = vdwg.mxu0
        %273 = vmatpush.msra.mxu0 0.0
        %274 = vmatpush.msra.mxu0 0.0
        %275 = vmatpush.msra.mxu0 0.0
        %276 = vmatpush.msra.mxu0 0.0
        %277 = vmatpush.msra.mxu0 0.0
        %278 = vmatpush.msra.mxu0 0.0
        %279 = vmatpush.msra.mxu0 0.0
        %280 = vmatpush.msra.mxu0 0.0
        %281 = vmatpush.msra.mxu0 0.0
        %282 = vmatpush.msra.mxu0 0.0
        %283 = vmatpush.msra.mxu0 0.0
        %284 = vmatpush.msra.mxu0 0.0
        %285 = vmatpush.msra.mxu0 0.0
        %286 = vmatpush.msra.mxu0 0.0
        %287 = vmatpush.msra.mxu0 0.0
        %v288 = vand.u32 %v217, 4294901760
        %v289 = vsub.f32 %v217, %v288
        %290 = vmatpush.msra.mxu0 %v289
        %v291 = vand.u32 %v214, 4294901760
        %v292 = vsub.f32 %v214, %v291
        %293 = vmatmul.f32.gmra.mxu0 %v292
        %v294 = vpop.f32.mrf.mxu0
        %v295 = vadd.f32 %v271, %v294
        %296 = vdwg.mxu0
        %297 = vmatpush.msra.mxu0 0.0
        %298 = vmatpush.msra.mxu0 0.0
        %299 = vmatpush.msra.mxu0 0.0
        %300 = vmatpush.msra.mxu0 0.0
        %301 = vmatpush.msra.mxu0 0.0
        %302 = vmatpush.msra.mxu0 0.0
        %303 = vmatpush.msra.mxu0 0.0
        %304 = vmatpush.msra.mxu0 0.0
        %305 = vmatpush.msra.mxu0 0.0
        %306 = vmatpush.msra.mxu0 0.0
        %307 = vmatpush.msra.mxu0 0.0
        %308 = vmatpush.msra.mxu0 0.0
        %309 = vmatpush.msra.mxu0 0.0
        %310 = vmatpush.msra.mxu0 0.0
        %311 = vmatpush.msra.mxu0 0.0
        %v312 = vand.u32 %v217, 4294901760
        %313 = vmatpush.msra.mxu0 %v312
        %v314 = vand.u32 %v214, 4294901760
        %v315 = vsub.f32 %v214, %v314
        %v316 = vand.u32 %v315, 4294901760
        %317 = vmatmul.f32.gmra.mxu0 %v316
        %v318 = vpop.f32.mrf.mxu0
        %v319 = vadd.f32 %v295, %v318
        %320 = vdwg.mxu0
        %321 = vmatpush.msra.mxu0 0.0
        %322 = vmatpush.msra.mxu0 0.0
        %323 = vmatpush.msra.mxu0 0.0
        %324 = vmatpush.msra.mxu0 0.0
        %325 = vmatpush.msra.mxu0 0.0
        %326 = vmatpush.msra.mxu0 0.0
        %327 = vmatpush.msra.mxu0 0.0
        %328 = vmatpush.msra.mxu0 0.0
        %329 = vmatpush.msra.mxu0 0.0
        %330 = vmatpush.msra.mxu0 0.0
        %331 = vmatpush.msra.mxu0 0.0
        %332 = vmatpush.msra.mxu0 0.0
        %333 = vmatpush.msra.mxu0 0.0
        %334 = vmatpush.msra.mxu0 0.0
        %335 = vmatpush.msra.mxu0 0.0
        %v336 = vand.u32 %v217, 4294901760
        %v337 = vsub.f32 %v217, %v336
        %v338 = vand.u32 %v337, 4294901760
        %339 = vmatpush.msra.mxu0 %v338
        %v340 = vand.u32 %v214, 4294901760
        %341 = vmatmul.f32.gmra.mxu0 %v340
        %v342 = vpop.f32.mrf.mxu0
        %v343 = vadd.f32 %v319, %v342
        %344 = vdwg.mxu0
        %345 = vmatpush.msra.mxu0 0.0
        %346 = vmatpush.msra.mxu0 0.0
        %347 = vmatpush.msra.mxu0 0.0
        %348 = vmatpush.msra.mxu0 0.0
        %349 = vmatpush.msra.mxu0 0.0
        %350 = vmatpush.msra.mxu0 0.0
        %351 = vmatpush.msra.mxu0 0.0
        %352 = vmatpush.msra.mxu0 0.0
        %353 = vmatpush.msra.mxu0 0.0
        %354 = vmatpush.msra.mxu0 0.0
        %355 = vmatpush.msra.mxu0 0.0
        %356 = vmatpush.msra.mxu0 0.0
        %357 = vmatpush.msra.mxu0 0.0
        %358 = vmatpush.msra.mxu0 0.0
        %359 = vmatpush.msra.mxu0 0.0
        %v360 = vand.u32 %v217, 4294901760
        %361 = vmatpush.msra.mxu0 %v360
        %v362 = vand.u32 %v214, 4294901760
        %363 = vmatmul.f32.gmra.mxu0 %v362
        %v364 = vpop.f32.mrf.mxu0
        %v365 = vadd.f32 %v343, %v364
        %366 = vdwg.mxu0
        %367 = vmatpush.msra.mxu0 0.0
        %368 = vmatpush.msra.mxu0 0.0
        %369 = vmatpush.msra.mxu0 0.0
        %370 = vmatpush.msra.mxu0 0.0
        %371 = vmatpush.msra.mxu0 0.0
        %372 = vmatpush.msra.mxu0 0.0
        %373 = vmatpush.msra.mxu0 0.0
        %374 = vmatpush.msra.mxu0 0.0
        %375 = vmatpush.msra.mxu0 0.0
        %376 = vmatpush.msra.mxu0 0.0
        %377 = vmatpush.msra.mxu0 0.0
        %378 = vmatpush.msra.mxu0 0.0
        %379 = vmatpush.msra.mxu0 0.0
        %380 = vmatpush.msra.mxu0 0.0
        %381 = vmatpush.msra.mxu0 0.0
        %v382 = vand.u32 %v219, 4294901760
        %383 = vmatpush.msra.mxu0 %v382
        %v384 = vand.u32 %v214, 4294901760
        %v385 = vsub.f32 %v214, %v384
        %v386 = vand.u32 %v385, 4294901760
        %v387 = vsub.f32 %v385, %v386
        %v388 = vand.u32 %v387, 4294901760
        %389 = vmatmul.f32.gmra.mxu0 %v388
        %v390 = vpop.f32.mrf.mxu0
        %v391 = vadd.f32 %v206, %v390
        %392 = vdwg.mxu0
        %393 = vmatpush.msra.mxu0 0.0
        %394 = vmatpush.msra.mxu0 0.0
        %395 = vmatpush.msra.mxu0 0.0
        %396 = vmatpush.msra.mxu0 0.0
        %397 = vmatpush.msra.mxu0 0.0
        %398 = vmatpush.msra.mxu0 0.0
        %399 = vmatpush.msra.mxu0 0.0
        %400 = vmatpush.msra.mxu0 0.0
        %401 = vmatpush.msra.mxu0 0.0
        %402 = vmatpush.msra.mxu0 0.0
        %403 = vmatpush.msra.mxu0 0.0
        %404 = vmatpush.msra.mxu0 0.0
        %405 = vmatpush.msra.mxu0 0.0
        %406 = vmatpush.msra.mxu0 0.0
        %407 = vmatpush.msra.mxu0 0.0
        %v408 = vand.u32 %v219, 4294901760
        %v409 = vsub.f32 %v219, %v408
        %v410 = vand.u32 %v409, 4294901760
        %v411 = vsub.f32 %v409, %v410
        %v412 = vand.u32 %v411, 4294901760
        %413 = vmatpush.msra.mxu0 %v412
        %v414 = vand.u32 %v214, 4294901760
        %415 = vmatmul.f32.gmra.mxu0 %v414
        %v416 = vpop.f32.mrf.mxu0
        %v417 = vadd.f32 %v391, %v416
        %418 = vdwg.mxu0
        %419 = vmatpush.msra.mxu0 0.0
        %420 = vmatpush.msra.mxu0 0.0
        %421 = vmatpush.msra.mxu0 0.0
        %422 = vmatpush.msra.mxu0 0.0
        %423 = vmatpush.msra.mxu0 0.0
        %424 = vmatpush.msra.mxu0 0.0
        %425 = vmatpush.msra.mxu0 0.0
        %426 = vmatpush.msra.mxu0 0.0
        %427 = vmatpush.msra.mxu0 0.0
        %428 = vmatpush.msra.mxu0 0.0
        %429 = vmatpush.msra.mxu0 0.0
        %430 = vmatpush.msra.mxu0 0.0
        %431 = vmatpush.msra.mxu0 0.0
        %432 = vmatpush.msra.mxu0 0.0
        %433 = vmatpush.msra.mxu0 0.0
        %v434 = vand.u32 %v219, 4294901760
        %v435 = vsub.f32 %v219, %v434
        %436 = vmatpush.msra.mxu0 %v435
        %v437 = vand.u32 %v214, 4294901760
        %v438 = vsub.f32 %v214, %v437
        %439 = vmatmul.f32.gmra.mxu0 %v438
        %v440 = vpop.f32.mrf.mxu0
        %v441 = vadd.f32 %v417, %v440
        %442 = vdwg.mxu0
        %443 = vmatpush.msra.mxu0 0.0
        %444 = vmatpush.msra.mxu0 0.0
        %445 = vmatpush.msra.mxu0 0.0
        %446 = vmatpush.msra.mxu0 0.0
        %447 = vmatpush.msra.mxu0 0.0
        %448 = vmatpush.msra.mxu0 0.0
        %449 = vmatpush.msra.mxu0 0.0
        %450 = vmatpush.msra.mxu0 0.0
        %451 = vmatpush.msra.mxu0 0.0
        %452 = vmatpush.msra.mxu0 0.0
        %453 = vmatpush.msra.mxu0 0.0
        %454 = vmatpush.msra.mxu0 0.0
        %455 = vmatpush.msra.mxu0 0.0
        %456 = vmatpush.msra.mxu0 0.0
        %457 = vmatpush.msra.mxu0 0.0
        %v458 = vand.u32 %v219, 4294901760
        %459 = vmatpush.msra.mxu0 %v458
        %v460 = vand.u32 %v214, 4294901760
        %v461 = vsub.f32 %v214, %v460
        %v462 = vand.u32 %v461, 4294901760
        %463 = vmatmul.f32.gmra.mxu0 %v462
        %v464 = vpop.f32.mrf.mxu0
        %v465 = vadd.f32 %v441, %v464
        %466 = vdwg.mxu0
        %467 = vmatpush.msra.mxu0 0.0
        %468 = vmatpush.msra.mxu0 0.0
        %469 = vmatpush.msra.mxu0 0.0
        %470 = vmatpush.msra.mxu0 0.0
        %471 = vmatpush.msra.mxu0 0.0
        %472 = vmatpush.msra.mxu0 0.0
        %473 = vmatpush.msra.mxu0 0.0
        %474 = vmatpush.msra.mxu0 0.0
        %475 = vmatpush.msra.mxu0 0.0
        %476 = vmatpush.msra.mxu0 0.0
        %477 = vmatpush.msra.mxu0 0.0
        %478 = vmatpush.msra.mxu0 0.0
        %479 = vmatpush.msra.mxu0 0.0
        %480 = vmatpush.msra.mxu0 0.0
        %481 = vmatpush.msra.mxu0 0.0
        %v482 = vand.u32 %v219, 4294901760
        %v483 = vsub.f32 %v219, %v482
        %v484 = vand.u32 %v483, 4294901760
        %485 = vmatpush.msra.mxu0 %v484
        %v486 = vand.u32 %v214, 4294901760
        %487 = vmatmul.f32.gmra.mxu0 %v486
        %v488 = vpop.f32.mrf.mxu0
        %v489 = vadd.f32 %v465, %v488
        %490 = vdwg.mxu0
        %491 = vmatpush.msra.mxu0 0.0
        %492 = vmatpush.msra.mxu0 0.0
        %493 = vmatpush.msra.mxu0 0.0
        %494 = vmatpush.msra.mxu0 0.0
        %495 = vmatpush.msra.mxu0 0.0
        %496 = vmatpush.msra.mxu0 0.0
        %497 = vmatpush.msra.mxu0 0.0
        %498 = vmatpush.msra.mxu0 0.0
        %499 = vmatpush.msra.mxu0 0.0
        %500 = vmatpush.msra.mxu0 0.0
        %501 = vmatpush.msra.mxu0 0.0
        %502 = vmatpush.msra.mxu0 0.0
        %503 = vmatpush.msra.mxu0 0.0
        %504 = vmatpush.msra.mxu0 0.0
        %505 = vmatpush.msra.mxu0 0.0
        %v506 = vand.u32 %v219, 4294901760
        %507 = vmatpush.msra.mxu0 %v506
        %v508 = vand.u32 %v214, 4294901760
        %509 = vmatmul.f32.gmra.mxu0 %v508
        %v510 = vpop.f32.mrf.mxu0
        %v511 = vadd.f32 %v489, %v510
        %512 = vdwg.mxu0
        %513 = vst [vmem:[%s188] sm:$0xff] %v365
        %514 = vst [vmem:[%s188 + $0x8] sm:$0xff] %v511
        %s515 = sand.u32 %s109, 1
        %s516 = scalar_lea.sflag [#allocation3], %s515
        %s517 = sand.u32 %s109, 1
        %s518 = smul.addr %s517, 16
        %s519 = scalar_lea.vmem [#allocation2], %s518
        // Predicated region
        $region33: #{tpu_custom_call.1} parent=31 // pred_check
          %p520 = pneg %p119
        $region34: #{tpu_custom_call.1} parent=31 // pred_check_branch
          %522 = sbr.rel (%p520) target = $region36
        $region35: #{tpu_custom_call.1} parent=31 // pred_region
          %s523 = smul.u32 2, %s22
          %525 = vsyncadd %s516, 0
          %s526 = smul.addr %s21, 2
          %s527 = sadd.s32 %s523, %s526
          %s528 = smul.addr %s527, 8
          %s529 = scalar_lea.hbm %s3, %s528
          %s531 = sshll.u32 %s519, 4
          %s532 = int_to_ptr.vmem [resolvable:$true] %s531
          %s533 = sshll.u32 %s529, 4
          %s534 = int_to_ptr.hbm [resolvable:$true] %s533
          %536 = dma.vmem_to_hbm [thread:$0]  %s532, 256, %s534, %s516
        $region36: #{tpu_custom_call.1} parent=31 // pred_fallthru
          _
      $region32: #{tpu_custom_call.1} parent=5 // pred_fallthru
        _
      %p537 = scmp.le.s32.totalorder 2, %s12
      // Predicated region
      $region37: #{tpu_custom_call.1} parent=5 // pred_check
        %p538 = pneg %p537
      $region38: #{tpu_custom_call.1} parent=5 // pred_check_branch
        %540 = sbr.rel (%p538) target = $region40
      $region39: #{tpu_custom_call.1} parent=5 // pred_region
        %s541 = ssub.s32 %s12, 2
        // Predicated region
        $region41: #{tpu_custom_call.1} parent=39 // pred_check
          %p542 = pneg %p125
        $region42: #{tpu_custom_call.1} parent=39 // pred_check_branch
          %544 = sbr.rel (%p542) target = $region44
        $region43: #{tpu_custom_call.1} parent=39 // pred_region
          %s545 = sand.u32 %s110, 1
          %s546 = scalar_lea.sflag [#allocation3], %s545
          %s547 = sand.u32 %s110, 1
          %s548 = smul.addr %s547, 16
          %s549 = scalar_lea.vmem [#allocation2], %s548
          %551 = dma.done %s546, 256
        $region44: #{tpu_custom_call.1} parent=39 // pred_fallthru
          _
      $region40: #{tpu_custom_call.1} parent=5 // pred_fallthru
        _
    $region6: #{tpu_custom_call.1} parent=1 // loop_footer
      %s16 = sadd.s32 1, %s12
    $region7: #{tpu_custom_call.1} parent=1 // loop_footer_branch
      %11 = sbr.rel target = $region3
    $region8: #{tpu_custom_call.1} parent=1 // loop_exit
      _
    %552 = vsyncpa [#allocation3], 1
    %s553 = scalar_lea.sflag [#allocation3], 1
    %554 = vsyncpa %s553, 1

</llo_original>
